<compile_context>
chip_gen: v6e
topology: v6e:2x2x1
jax: 0.10.0
libtpu: 0.0.40
codegen_flags: <defaults>
</compile_context>

<pallas_src>
import functools

import jax
import jax.numpy as jnp
import numpy as np
from jax.experimental import pallas as pl
from jax.experimental.pallas import tpu as pltpu


def _conv_gn_relu_kernel(x_ref, w_ref, gamma_ref, beta_ref, mask_ref, o_ref,
                         *, nb, Cin, Cout, H, W, KH, KW, padding, G, eps):
    """Fused conv3x3(+bias) + GroupNorm + ReLU on `nb` samples.

    x_ref:     (nb, Cin, H*W)        activations, spatial flattened (lane-dense)
    w_ref:     (Cout, KH*KW*Cin+1)   conv weight (kh,kw,cin minor order) + bias column
    gamma_ref: (Cout, 1)             GN scale (f32)
    beta_ref:  (Cout, 1)             GN shift (f32)
    mask_ref:  (KH*KW, 1, H*W)       precomputed 0/1 boundary mask per conv tap
    o_ref:     (nb, Cout, H*W)       output (NCHW with spatial flattened)
    """
    HW = H * W
    Cg = Cout // G
    K = KH * KW

    w = w_ref[...]                          # (Cout, K*Cin+1) compute dtype
    gamma = gamma_ref[...]                  # (Cout, 1) f32
    beta = beta_ref[...]                    # (Cout, 1) f32

    # Hoisted constants (built/loaded once per grid step, reused by all samples).
    masks = [mask_ref[t] for t in range(K)]                  # each (1, HW)
    gams = [gamma[g * Cg:(g + 1) * Cg, :] for g in range(G)]  # each (Cg, 1)
    bets = [beta[g * Cg:(g + 1) * Cg, :] for g in range(G)]
    ones_row = jnp.ones((1, HW), x_ref.dtype)  # folds conv bias into the matmul
    inv_cnt = 1.0 / float(Cg * HW)

    for b in range(nb):                     # static unroll; samples packed per grid step
        x = x_ref[b]                        # (Cin, HW)

        # ---- im2col slab in VMEM: per tap, shift along the flattened (lane)
        # axis and multiply by the precomputed 0/1 boundary mask (replaces the
        # explicit zero padding of the conv). ---------------------------------
        rows = []
        for t in range(K):
            kh, kw = t // KW, t % KW
            dh, dw = kh - padding, kw - padding
            s = dh * W + dw                 # flat lane shift for this tap
            if s == 0:
                tap = x
            elif s > 0:
                tap = jnp.concatenate(
                    [x[:, s:], jnp.zeros((Cin, s), x.dtype)], axis=1)
            else:
                tap = jnp.concatenate(
                    [jnp.zeros((Cin, -s), x.dtype), x[:, :s]], axis=1)
            if not (dh == 0 and dw == 0):   # center tap needs no mask
                tap = tap * masks[t]        # broadcast (1,HW) over Cin sublanes
            rows.append(tap)
        rows.append(ones_row)
        patches = jnp.concatenate(rows, axis=0)              # (K*Cin+1, HW)

        # ---- conv (+bias) as a single MXU matmul, f32 accumulation -----------
        y = jnp.dot(w, patches, preferred_element_type=jnp.float32)  # (Cout, HW)

        # ---- GroupNorm (single-pass sum / sumsq in f32) + affine + ReLU ------
        for g in range(G):
            blk = y[g * Cg:(g + 1) * Cg, :]                  # (Cg, HW) f32
            s1 = jnp.sum(blk, keepdims=True)                 # (1, 1)
            s2 = jnp.sum(blk * blk, keepdims=True)           # (1, 1)
            mean = s1 * inv_cnt
            var = jnp.maximum(s2 * inv_cnt - mean * mean, 0.0)
            inv_std = jax.lax.rsqrt(var + eps)
            out_blk = jnp.maximum((blk - mean) * inv_std * gams[g] + bets[g], 0.0)
            o_ref[b, g * Cg:(g + 1) * Cg, :] = out_blk.astype(o_ref.dtype)


def _pick_samples_per_block(N, Cin, Cout, HW, bytes_per_elem=4,
                            vmem_budget=16 * 1024 * 1024):
    # Pack samples per grid step (amortize ~0.35us per-step overhead) while
    # (a) keeping >= 2 grid steps when possible so both v7x TensorCores get work
    # and (b) keeping the double-buffered in/out blocks within a VMEM budget.
    per_sample = 2 * (Cin * HW + Cout * HW) * bytes_per_elem
    for nb in (8, 4, 2):
        if N % nb == 0 and N // nb >= 2 and nb * per_sample <= vmem_budget:
            return nb
    return 1


def conv_gn_relu(x_nchw, weight_oihw, bias, gamma, beta,
                 *, stride=1, padding=1, group_channel=8, eps=1e-5,
                 compute_dtype=jnp.float32, samples_per_block=None):
    """Fused ConvGnReLU. Input/weight/output follow PyTorch conventions (NCHW / OIHW)."""
    assert stride == 1, "kernel implements stride=1 (module default)"
    N, Cin, H, W = x_nchw.shape
    Cout, Cin_w, KH, KW = weight_oihw.shape
    assert Cin_w == Cin
    # Output spatial must equal input spatial ('same' conv) — true for the module
    # default kernel_size=3, padding=1.
    assert 2 * padding == KH - 1 and 2 * padding == KW - 1, \
        "kernel specialized to 'same' conv (2*padding == kernel_size-1)"
    G = int(max(1, Cout // group_channel))
    assert Cout % G == 0
    HW = H * W
    K = KH * KW
    K1 = K * Cin + 1

    # Free metadata reshape (NCHW is contiguous) — no extra HBM pass.
    x2 = x_nchw.reshape(N, Cin, HW).astype(compute_dtype)

    # Tiny host-side weight prep: OIHW -> (Cout, KH*KW*Cin) in (kh, kw, cin) minor
    # order, with the conv bias appended as an extra matmul column.
    w_mat = jnp.transpose(weight_oihw, (0, 2, 3, 1)).reshape(Cout, K * Cin)
    w2 = jnp.concatenate([w_mat, bias.reshape(Cout, 1)], axis=1).astype(compute_dtype)
    g2 = gamma.reshape(Cout, 1).astype(jnp.float32)
    b2 = beta.reshape(Cout, 1).astype(jnp.float32)

    # Precomputed 0/1 boundary masks, one row per conv tap (replaces in-kernel
    # index compares / zero padding). Shape (K, 1, HW) so mask_ref[t] -> (1, HW).
    hh = np.repeat(np.arange(H), W)
    ww = np.tile(np.arange(W), H)
    mrows = []
    for kh in range(KH):
        for kw in range(KW):
            dh, dw = kh - padding, kw - padding
            mrows.append((hh + dh >= 0) & (hh + dh < H) &
                         (ww + dw >= 0) & (ww + dw < W))
    mask = jnp.asarray(
        np.stack(mrows, axis=0).astype(np.float32).reshape(K, 1, HW)
    ).astype(compute_dtype)

    nb = samples_per_block or _pick_samples_per_block(N, Cin, Cout, HW)
    assert N % nb == 0

    kern = functools.partial(_conv_gn_relu_kernel, nb=nb, Cin=Cin, Cout=Cout,
                             H=H, W=W, KH=KH, KW=KW, padding=padding, G=G, eps=eps)

    out_flat = pl.pallas_call(
        kern,
        out_shape=jax.ShapeDtypeStruct((N, Cout, HW), jnp.float32),
        grid=(N // nb,),
        in_specs=[
            pl.BlockSpec((nb, Cin, HW), lambda i: (i, 0, 0)),
            pl.BlockSpec((Cout, K1), lambda i: (0, 0)),
            pl.BlockSpec((Cout, 1), lambda i: (0, 0)),
            pl.BlockSpec((Cout, 1), lambda i: (0, 0)),
            pl.BlockSpec((K, 1, HW), lambda i: (0, 0, 0)),
        ],
        out_specs=pl.BlockSpec((nb, Cout, HW), lambda i: (i, 0, 0)),
        compiler_params=pltpu.CompilerParams(
            dimension_semantics=("parallel",),
            vmem_limit_bytes=32 * 1024 * 1024),
    )(x2, w2, g2, b2, mask)

    # Free metadata reshape back to NCHW.
    return out_flat.reshape(N, Cout, H, W)


def _reference(x_nchw, weight_oihw, bias, gamma, beta, *, group_channel=8, eps=1e-5):
    """Pure-JAX reference (lax conv + manual GroupNorm + ReLU), NCHW in/out."""
    out = jax.lax.conv_general_dilated(
        x_nchw.astype(jnp.float32), weight_oihw.astype(jnp.float32),
        window_strides=(1, 1), padding=((1, 1), (1, 1)),
        dimension_numbers=("NCHW", "OIHW", "NCHW"))
    out = out + bias.reshape(1, -1, 1, 1)
    N, C, H, W = out.shape
    G = int(max(1, C // group_channel))
    y = out.reshape(N, G, C // G, H, W)
    mean = jnp.mean(y, axis=(2, 3, 4), keepdims=True)
    var = jnp.mean(jnp.square(y - mean), axis=(2, 3, 4), keepdims=True)
    y = (y - mean) * jax.lax.rsqrt(var + eps)
    y = y.reshape(N, C, H, W) * gamma.reshape(1, -1, 1, 1) + beta.reshape(1, -1, 1, 1)
    return jnp.maximum(y, 0.0)


if __name__ == "__main__":
    # Shapes consistent with the module: Conv2d(4 -> 8, k=3, s=1, p=1),
    # GroupNorm(G=max(1, 8//8)=1, 8), ReLU.
    N, Cin, H, W = 2, 4, 16, 16
    Cout = 8

    key = jax.random.PRNGKey(0)
    kx, kw, kb = jax.random.split(key, 3)
    x = jax.random.normal(kx, (N, Cin, H, W), dtype=jnp.float32)
    weight = jax.random.normal(kw, (Cout, Cin, 3, 3), dtype=jnp.float32) * 0.1
    bias = jax.random.normal(kb, (Cout,), dtype=jnp.float32) * 0.1
    gamma = jnp.ones((Cout,), dtype=jnp.float32)   # GroupNorm default affine init
    beta = jnp.zeros((Cout,), dtype=jnp.float32)

    out = conv_gn_relu(x, weight, bias, gamma, beta,
                       stride=1, padding=1, group_channel=8)
    out = jax.block_until_ready(out)

    ref = _reference(x, weight, bias, gamma, beta, group_channel=8)
    np.testing.assert_allclose(np.asarray(out), np.asarray(ref), atol=1e-4, rtol=1e-4)

    print("KERNEL_OK")
</pallas_src>

<mosaic_0001>
module attributes {stable_mosaic.version = 11 : i64} {
  func.func @_conv_gn_relu_kernel(%arg0: i32, %arg1: memref<1x4x256xf32, #tpu.memory_space<vmem>>, %arg2: memref<8x37xf32, #tpu.memory_space<vmem>>, %arg3: memref<8x1xf32, #tpu.memory_space<vmem>>, %arg4: memref<8x1xf32, #tpu.memory_space<vmem>>, %arg5: memref<9x1x256xf32, #tpu.memory_space<vmem>>, %arg6: memref<1x8x256xf32, #tpu.memory_space<vmem>>) attributes {dimension_semantics = [#tpu.dimension_semantics<parallel>], iteration_bounds = array<i64: 2>, scalar_prefetch = 0 : i64, scratch_operands = 0 : i64, tpu.core_type = #tpu.core_type<tc>, window_params = [{transform_indices = @transform_0, window_bounds = array<i64: 1, 4, 256>}, {pipeline_mode = #tpu.pipeline_mode<synchronous>, transform_indices = @transform_1, window_bounds = array<i64: 8, 37>}, {pipeline_mode = #tpu.pipeline_mode<synchronous>, transform_indices = @transform_2, window_bounds = array<i64: 8, 1>}, {pipeline_mode = #tpu.pipeline_mode<synchronous>, transform_indices = @transform_3, window_bounds = array<i64: 8, 1>}, {pipeline_mode = #tpu.pipeline_mode<synchronous>, transform_indices = @transform_4, window_bounds = array<i64: 9, 1, 256>}, {transform_indices = @transform_5, window_bounds = array<i64: 1, 8, 256>}]} {
    %c0 = arith.constant 0 : index
    %c0_0 = arith.constant 0 : index
    %0 = vector.load %arg2[%c0, %c0_0] : memref<8x37xf32, #tpu.memory_space<vmem>>, vector<8x37xf32>
    %c0_1 = arith.constant 0 : index
    %c0_2 = arith.constant 0 : index
    %1 = vector.load %arg3[%c0_1, %c0_2] : memref<8x1xf32, #tpu.memory_space<vmem>>, vector<8x1xf32>
    %c0_3 = arith.constant 0 : index
    %c0_4 = arith.constant 0 : index
    %2 = vector.load %arg4[%c0_3, %c0_4] : memref<8x1xf32, #tpu.memory_space<vmem>>, vector<8x1xf32>
    %c0_5 = arith.constant 0 : index
    %c0_6 = arith.constant 0 : index
    %c0_7 = arith.constant 0 : index
    %3 = vector.load %arg5[%c0_5, %c0_6, %c0_7] : memref<9x1x256xf32, #tpu.memory_space<vmem>>, vector<1x1x256xf32>
    %4 = vector.shape_cast %3 : vector<1x1x256xf32> to vector<1x256xf32>
    %c1 = arith.constant 1 : index
    %c0_8 = arith.constant 0 : index
    %c0_9 = arith.constant 0 : index
    %5 = vector.load %arg5[%c1, %c0_8, %c0_9] : memref<9x1x256xf32, #tpu.memory_space<vmem>>, vector<1x1x256xf32>
    %6 = vector.shape_cast %5 : vector<1x1x256xf32> to vector<1x256xf32>
    %c2 = arith.constant 2 : index
    %c0_10 = arith.constant 0 : index
    %c0_11 = arith.constant 0 : index
    %7 = vector.load %arg5[%c2, %c0_10, %c0_11] : memref<9x1x256xf32, #tpu.memory_space<vmem>>, vector<1x1x256xf32>
    %8 = vector.shape_cast %7 : vector<1x1x256xf32> to vector<1x256xf32>
    %c3 = arith.constant 3 : index
    %c0_12 = arith.constant 0 : index
    %c0_13 = arith.constant 0 : index
    %9 = vector.load %arg5[%c3, %c0_12, %c0_13] : memref<9x1x256xf32, #tpu.memory_space<vmem>>, vector<1x1x256xf32>
    %10 = vector.shape_cast %9 : vector<1x1x256xf32> to vector<1x256xf32>
    %c5 = arith.constant 5 : index
    %c0_14 = arith.constant 0 : index
    %c0_15 = arith.constant 0 : index
    %11 = vector.load %arg5[%c5, %c0_14, %c0_15] : memref<9x1x256xf32, #tpu.memory_space<vmem>>, vector<1x1x256xf32>
    %12 = vector.shape_cast %11 : vector<1x1x256xf32> to vector<1x256xf32>
    %c6 = arith.constant 6 : index
    %c0_16 = arith.constant 0 : index
    %c0_17 = arith.constant 0 : index
    %13 = vector.load %arg5[%c6, %c0_16, %c0_17] : memref<9x1x256xf32, #tpu.memory_space<vmem>>, vector<1x1x256xf32>
    %14 = vector.shape_cast %13 : vector<1x1x256xf32> to vector<1x256xf32>
    %c7 = arith.constant 7 : index
    %c0_18 = arith.constant 0 : index
    %c0_19 = arith.constant 0 : index
    %15 = vector.load %arg5[%c7, %c0_18, %c0_19] : memref<9x1x256xf32, #tpu.memory_space<vmem>>, vector<1x1x256xf32>
    %16 = vector.shape_cast %15 : vector<1x1x256xf32> to vector<1x256xf32>
    %c8 = arith.constant 8 : index
    %c0_20 = arith.constant 0 : index
    %c0_21 = arith.constant 0 : index
    %17 = vector.load %arg5[%c8, %c0_20, %c0_21] : memref<9x1x256xf32, #tpu.memory_space<vmem>>, vector<1x1x256xf32>
    %18 = vector.shape_cast %17 : vector<1x1x256xf32> to vector<1x256xf32>
    %cst = arith.constant 1.000000e+00 : f32
    %19 = vector.broadcast %cst : f32 to vector<1x256xf32>
    %c0_22 = arith.constant 0 : index
    %c0_23 = arith.constant 0 : index
    %c0_24 = arith.constant 0 : index
    %20 = vector.load %arg1[%c0_22, %c0_23, %c0_24] : memref<1x4x256xf32, #tpu.memory_space<vmem>>, vector<1x4x256xf32>
    %21 = vector.shape_cast %20 : vector<1x4x256xf32> to vector<4x256xf32>
    %cst_25 = arith.constant 0.000000e+00 : f32
    %22 = vector.broadcast %cst_25 : f32 to vector<4x17xf32>
    %23 = vector.extract_strided_slice %21 {offsets = [0, 0], sizes = [4, 239], strides = [1, 1]} : vector<4x256xf32> to vector<4x239xf32>
    %24 = tpu.concatenate %22, %23 in 1 : vector<4x17xf32>, vector<4x239xf32> -> vector<4x256xf32>
    %25 = vector.broadcast %4 : vector<1x256xf32> to vector<4x256xf32>
    %26 = arith.mulf %24, %25 : vector<4x256xf32>
    %cst_26 = arith.constant 0.000000e+00 : f32
    %27 = vector.broadcast %cst_26 : f32 to vector<4x16xf32>
    %28 = vector.extract_strided_slice %21 {offsets = [0, 0], sizes = [4, 240], strides = [1, 1]} : vector<4x256xf32> to vector<4x240xf32>
    %29 = tpu.concatenate %27, %28 in 1 : vector<4x16xf32>, vector<4x240xf32> -> vector<4x256xf32>
    %30 = vector.broadcast %6 : vector<1x256xf32> to vector<4x256xf32>
    %31 = arith.mulf %29, %30 : vector<4x256xf32>
    %cst_27 = arith.constant 0.000000e+00 : f32
    %32 = vector.broadcast %cst_27 : f32 to vector<4x15xf32>
    %33 = vector.extract_strided_slice %21 {offsets = [0, 0], sizes = [4, 241], strides = [1, 1]} : vector<4x256xf32> to vector<4x241xf32>
    %34 = tpu.concatenate %32, %33 in 1 : vector<4x15xf32>, vector<4x241xf32> -> vector<4x256xf32>
    %35 = vector.broadcast %8 : vector<1x256xf32> to vector<4x256xf32>
    %36 = arith.mulf %34, %35 : vector<4x256xf32>
    %cst_28 = arith.constant 0.000000e+00 : f32
    %37 = vector.broadcast %cst_28 : f32 to vector<4x1xf32>
    %38 = vector.extract_strided_slice %21 {offsets = [0, 0], sizes = [4, 255], strides = [1, 1]} : vector<4x256xf32> to vector<4x255xf32>
    %39 = tpu.concatenate %37, %38 in 1 : vector<4x1xf32>, vector<4x255xf32> -> vector<4x256xf32>
    %40 = vector.broadcast %10 : vector<1x256xf32> to vector<4x256xf32>
    %41 = arith.mulf %39, %40 : vector<4x256xf32>
    %42 = vector.extract_strided_slice %21 {offsets = [0, 1], sizes = [4, 255], strides = [1, 1]} : vector<4x256xf32> to vector<4x255xf32>
    %cst_29 = arith.constant 0.000000e+00 : f32
    %43 = vector.broadcast %cst_29 : f32 to vector<4x1xf32>
    %44 = tpu.concatenate %42, %43 in 1 : vector<4x255xf32>, vector<4x1xf32> -> vector<4x256xf32>
    %45 = vector.broadcast %12 : vector<1x256xf32> to vector<4x256xf32>
    %46 = arith.mulf %44, %45 : vector<4x256xf32>
    %47 = vector.extract_strided_slice %21 {offsets = [0, 15], sizes = [4, 241], strides = [1, 1]} : vector<4x256xf32> to vector<4x241xf32>
    %cst_30 = arith.constant 0.000000e+00 : f32
    %48 = vector.broadcast %cst_30 : f32 to vector<4x15xf32>
    %49 = tpu.concatenate %47, %48 in 1 : vector<4x241xf32>, vector<4x15xf32> -> vector<4x256xf32>
    %50 = vector.broadcast %14 : vector<1x256xf32> to vector<4x256xf32>
    %51 = arith.mulf %49, %50 : vector<4x256xf32>
    %52 = vector.extract_strided_slice %21 {offsets = [0, 16], sizes = [4, 240], strides = [1, 1]} : vector<4x256xf32> to vector<4x240xf32>
    %cst_31 = arith.constant 0.000000e+00 : f32
    %53 = vector.broadcast %cst_31 : f32 to vector<4x16xf32>
    %54 = tpu.concatenate %52, %53 in 1 : vector<4x240xf32>, vector<4x16xf32> -> vector<4x256xf32>
    %55 = vector.broadcast %16 : vector<1x256xf32> to vector<4x256xf32>
    %56 = arith.mulf %54, %55 : vector<4x256xf32>
    %57 = vector.extract_strided_slice %21 {offsets = [0, 17], sizes = [4, 239], strides = [1, 1]} : vector<4x256xf32> to vector<4x239xf32>
    %cst_32 = arith.constant 0.000000e+00 : f32
    %58 = vector.broadcast %cst_32 : f32 to vector<4x17xf32>
    %59 = tpu.concatenate %57, %58 in 1 : vector<4x239xf32>, vector<4x17xf32> -> vector<4x256xf32>
    %60 = vector.broadcast %18 : vector<1x256xf32> to vector<4x256xf32>
    %61 = arith.mulf %59, %60 : vector<4x256xf32>
    %62 = tpu.concatenate %26, %31, %36, %41, %21, %46, %51, %56, %61, %19 in 0 : vector<4x256xf32>, vector<4x256xf32>, vector<4x256xf32>, vector<4x256xf32>, vector<4x256xf32>, vector<4x256xf32>, vector<4x256xf32>, vector<4x256xf32>, vector<4x256xf32>, vector<1x256xf32> -> vector<37x256xf32>
    %cst_33 = arith.constant dense<0.000000e+00> : vector<8x256xf32>
    %63 = tpu.matmul %0, %62, %cst_33 {dimension_numbers = #tpu.dot_dimension_numbers<[1], [0], [0], [1], [0, 0, 1, 1], [], []>} : vector<8x37xf32>, vector<37x256xf32>, vector<8x256xf32> -> vector<8x256xf32>
    %64 = vector.shape_cast %63 : vector<8x256xf32> to vector<1x8x256xf32>
    %cst_34 = arith.constant dense<0.000000e+00> : vector<1xf32>
    %65 = vector.multi_reduction <add>, %64, %cst_34 [1, 2] : vector<1x8x256xf32> to vector<1xf32>
    %66 = vector.shape_cast %65 : vector<1xf32> to vector<1x1x1xf32>
    %67 = vector.extract %66[0, 0, 0] : f32 from vector<1x1x1xf32>
    %68 = vector.broadcast %67 : f32 to vector<1x1xf32>
    %69 = arith.mulf %63, %63 : vector<8x256xf32>
    %70 = vector.shape_cast %69 : vector<8x256xf32> to vector<1x8x256xf32>
    %cst_35 = arith.constant dense<0.000000e+00> : vector<1xf32>
    %71 = vector.multi_reduction <add>, %70, %cst_35 [1, 2] : vector<1x8x256xf32> to vector<1xf32>
    %72 = vector.shape_cast %71 : vector<1xf32> to vector<1x1x1xf32>
    %73 = vector.extract %72[0, 0, 0] : f32 from vector<1x1x1xf32>
    %74 = vector.broadcast %73 : f32 to vector<1x1xf32>
    %cst_36 = arith.constant 4.8828125E-4 : f32
    %75 = vector.broadcast %cst_36 : f32 to vector<1x1xf32>
    %76 = arith.mulf %68, %75 : vector<1x1xf32>
    %cst_37 = arith.constant 4.8828125E-4 : f32
    %77 = vector.broadcast %cst_37 : f32 to vector<1x1xf32>
    %78 = arith.mulf %74, %77 : vector<1x1xf32>
    %79 = arith.mulf %76, %76 : vector<1x1xf32>
    %80 = arith.subf %78, %79 : vector<1x1xf32>
    %cst_38 = arith.constant 0.000000e+00 : f32
    %81 = vector.broadcast %cst_38 : f32 to vector<1x1xf32>
    %82 = arith.maximumf %80, %81 : vector<1x1xf32>
    %cst_39 = arith.constant 9.99999974E-6 : f32
    %83 = vector.broadcast %cst_39 : f32 to vector<1x1xf32>
    %84 = arith.addf %82, %83 : vector<1x1xf32>
    %85 = math.rsqrt %84 : vector<1x1xf32>
    %86 = vector.broadcast %76 : vector<1x1xf32> to vector<8x256xf32>
    %87 = arith.subf %63, %86 : vector<8x256xf32>
    %88 = vector.broadcast %85 : vector<1x1xf32> to vector<8x256xf32>
    %89 = arith.mulf %87, %88 : vector<8x256xf32>
    %90 = vector.broadcast %1 : vector<8x1xf32> to vector<8x256xf32>
    %91 = arith.mulf %89, %90 : vector<8x256xf32>
    %92 = vector.broadcast %2 : vector<8x1xf32> to vector<8x256xf32>
    %93 = arith.addf %91, %92 : vector<8x256xf32>
    %cst_40 = arith.constant 0.000000e+00 : f32
    %94 = vector.broadcast %cst_40 : f32 to vector<8x256xf32>
    %95 = arith.maximumf %93, %94 : vector<8x256xf32>
    %c0_41 = arith.constant 0 : index
    %c0_42 = arith.constant 0 : index
    %c0_43 = arith.constant 0 : index
    %96 = vector.load %arg6[%c0_41, %c0_42, %c0_43] : memref<1x8x256xf32, #tpu.memory_space<vmem>>, vector<1x8x256xf32>
    %97 = vector.shape_cast %96 : vector<1x8x256xf32> to vector<8x256xf32>
    %98 = vector.shape_cast %95 : vector<8x256xf32> to vector<1x8x256xf32>
    tpu.vector_store %arg6[%c0_41, %c0_42, %c0_43], %98 {strides = array<i32>} : memref<1x8x256xf32, #tpu.memory_space<vmem>>, vector<1x8x256xf32>,
    return
  }
  func.func @transform_0(%arg0: i32) -> (i32, i32, i32) {
    %c0_i32 = arith.constant 0 : i32
    %c0_i32_0 = arith.constant 0 : i32
    %c0_i32_1 = arith.constant 0 : i32
    return %arg0, %c0_i32, %c0_i32_0 : i32, i32, i32
  }
  func.func @transform_1(%arg0: i32) -> (i32, i32) {
    %c0_i32 = arith.constant 0 : i32
    %c0_i32_0 = arith.constant 0 : i32
    %c0_i32_1 = arith.constant 0 : i32
    return %c0_i32, %c0_i32_0 : i32, i32
  }
  func.func @transform_2(%arg0: i32) -> (i32, i32) {
    %c0_i32 = arith.constant 0 : i32
    %c0_i32_0 = arith.constant 0 : i32
    %c0_i32_1 = arith.constant 0 : i32
    return %c0_i32, %c0_i32_0 : i32, i32
  }
  func.func @transform_3(%arg0: i32) -> (i32, i32) {
    %c0_i32 = arith.constant 0 : i32
    %c0_i32_0 = arith.constant 0 : i32
    %c0_i32_1 = arith.constant 0 : i32
    return %c0_i32, %c0_i32_0 : i32, i32
  }
  func.func @transform_4(%arg0: i32) -> (i32, i32, i32) {
    %c0_i32 = arith.constant 0 : i32
    %c0_i32_0 = arith.constant 0 : i32
    %c0_i32_1 = arith.constant 0 : i32
    %c0_i32_2 = arith.constant 0 : i32
    return %c0_i32, %c0_i32_0, %c0_i32_1 : i32, i32, i32
  }
  func.func @transform_5(%arg0: i32) -> (i32, i32, i32) {
    %c0_i32 = arith.constant 0 : i32
    %c0_i32_0 = arith.constant 0 : i32
    %c0_i32_1 = arith.constant 0 : i32
    return %arg0, %c0_i32, %c0_i32_0 : i32, i32, i32
  }
}

</mosaic_0001>

<llo_original>
// kernel: tpu_custom_call.1
$region0: #{tpu_custom_call.1}
  #allocation0 [shape = 'u32[]', space=smem, size = 0x4, offset = 0x4, fixed_abs, tag = 'smem constant byte address 0x4 - core index']
  #allocation1 [shape = 'u32[144,128]{1,0:T(1,128)}', space=vmem, size = 0x12000, scoped, tag = 'internal scratch']
  %s0 = inlined_call_operand.hbm [shape: f32[2,4,256], index: 0, kind: input, shape index: {}]
  %s1 = inlined_call_operand.hbm [shape: f32[8,37], index: 1, kind: input, shape index: {}]
  %s2 = inlined_call_operand.vmem [shape: f32[8,1], index: 2, kind: input, shape index: {}]
  %s3 = inlined_call_operand.vmem [shape: f32[8,1], index: 3, kind: input, shape index: {}]
  %s4 = inlined_call_operand.vmem [shape: f32[9,1,256], index: 4, kind: input, shape index: {}]
  %s5 = inlined_call_operand.hbm [shape: f32[2,8,256], index: 5, kind: output, shape index: {}]
  %s6 = sld [smem:[#allocation0]]
  $region61: #{tpu_custom_call.1} parent=0
    _
  %s8 = ssub.s32 1, %s6
  %s9 = scalar_select 0, %s8, %s6
  $region1: #{tpu_custom_call.1} parent=0
    #allocation2 [shape = 'u8[8192]{0}', space=vmem, size = 0x2000, scoped, tag = 'input window, operand 0']
    #allocation3 [shape = 's32[2]{0}', space=sflag, size = 0x8, scoped, tag = 'scoped memory for tpu_custom_call.1']
    #allocation4 [shape = 's32[2]{0}', space=sflag, size = 0x8, scoped, tag = 'scoped memory for tpu_custom_call.1']
    #allocation5 [shape = 'u8[4096]{0}', space=vmem, size = 0x1000, scoped, tag = 'input window, operand 1, single buffered']
    #allocation6 [shape = 's32[1]{0}', space=sflag, size = 0x4, scoped, tag = 'scoped memory for tpu_custom_call.1']
    #allocation7 [shape = 'u8[16384]{0}', space=vmem, size = 0x4000, scoped, tag = 'output window, operand 0']
    %10 = vsyncpa [#allocation3], 0
    %s11 = scalar_lea.sflag [#allocation3], 1
    %12 = vsyncpa %s11, 0
    %13 = vsyncpa [#allocation6], 0
    %14 = vsyncpa [#allocation4], 0
    %s15 = scalar_lea.sflag [#allocation4], 1
    %16 = vsyncpa %s15, 0
    loop: start=0, step=1, limit=4
    $region2: #{tpu_custom_call.1} parent=1 // loop_pre_header
      _
    $region3: #{tpu_custom_call.1} parent=1 // loop_header
      %s18 = sphi 0, %s22
      %p19 = scmp.ge.s32.totalorder %s18, 4
      %s28 = sphi 0, %s30
      %s31 = sphi 0, %s28
      %s32 = sphi 0, %s31
      %s48 = sphi 0, %s32
      %s52 = sphi 0, %s52
      %s54 = sphi 0, %s52
      %s55 = sphi 0, %s54
      %s69 = sphi 0, %s55
      %s73 = sphi 0, %s73
      %s75 = sphi 0, %s73
      %s76 = sphi 0, %s75
      %s90 = sphi 0, %s76
      %s94 = sphi 0, %s94
      %s96 = sphi 0, %s94
      %s97 = sphi 0, %s96
      %s111 = sphi 0, %s97
      %s115 = sphi 0, %s115
      %s117 = sphi 0, %s115
      %s118 = sphi 0, %s117
      %s132 = sphi 0, %s118
      %s138 = sphi 0, %s140
      %s141 = sphi 0, %s138
      %s142 = sphi 0, %s141
      %s158 = sphi 0, %s142
    $region4: #{tpu_custom_call.1} parent=1 // loop_header_branch
      %21 = sbr.rel (%p19) target = $region8
    $region5: #{tpu_custom_call.1} parent=1 // loop_body
      %s23 = ssub.s32 %s18, 1
      %s24 = ssub.s32 %s18, 2
      %s25 = sadd.s32 %s18, 1
      %s26 = ssub.s32 %s18, %s25
      %p27 = scmp.eq.s32.totalorder %s26, 0
      %s29 = sadd.s32 %s28, 1
      %s30 = scalar_select %p27, %s28, %s29
      %p33 = pneg %p27
      %p34 = scmp.eq.s32.totalorder %s18, 1
      %p35 = por %p33, %p34
      %p36 = scmp.ne.s32.totalorder %s28, %s31
      %p37 = scmp.eq.s32.totalorder %s18, 0
      %p38 = por %p36, %p37
      %p39 = scmp.ne.s32.totalorder %s28, %s31
      %p40 = scmp.eq.s32.totalorder %s23, 1
      %p41 = por %p39, %p40
      %p42 = scmp.ne.s32.totalorder %s31, %s32
      %p43 = scmp.eq.s32.totalorder %s23, 0
      %p44 = por %p42, %p43
      %p45 = scmp.ne.s32.totalorder %s31, %s32
      %p46 = scmp.eq.s32.totalorder %s24, 1
      %p47 = por %p45, %p46
      %p49 = scmp.ne.s32.totalorder %s32, %s48
      %p50 = scmp.eq.s32.totalorder %s24, 0
      %p51 = por %p49, %p50
      %s53 = sadd.s32 %s52, 1
      %p56 = scmp.eq.s32.totalorder %s18, 1
      %p57 = scmp.ne.s32.totalorder %s52, %s54
      %p58 = scmp.eq.s32.totalorder %s18, 0
      %p59 = por %p57, %p58
      %p60 = scmp.ne.s32.totalorder %s52, %s54
      %p61 = scmp.eq.s32.totalorder %s23, 1
      %p62 = por %p60, %p61
      %p63 = scmp.ne.s32.totalorder %s54, %s55
      %p64 = scmp.eq.s32.totalorder %s23, 0
      %p65 = por %p63, %p64
      %p66 = scmp.ne.s32.totalorder %s54, %s55
      %p67 = scmp.eq.s32.totalorder %s24, 1
      %p68 = por %p66, %p67
      %p70 = scmp.ne.s32.totalorder %s55, %s69
      %p71 = scmp.eq.s32.totalorder %s24, 0
      %p72 = por %p70, %p71
      %s74 = sadd.s32 %s73, 1
      %p77 = scmp.eq.s32.totalorder %s18, 1
      %p78 = scmp.ne.s32.totalorder %s73, %s75
      %p79 = scmp.eq.s32.totalorder %s18, 0
      %p80 = por %p78, %p79
      %p81 = scmp.ne.s32.totalorder %s73, %s75
      %p82 = scmp.eq.s32.totalorder %s23, 1
      %p83 = por %p81, %p82
      %p84 = scmp.ne.s32.totalorder %s75, %s76
      %p85 = scmp.eq.s32.totalorder %s23, 0
      %p86 = por %p84, %p85
      %p87 = scmp.ne.s32.totalorder %s75, %s76
      %p88 = scmp.eq.s32.totalorder %s24, 1
      %p89 = por %p87, %p88
      %p91 = scmp.ne.s32.totalorder %s76, %s90
      %p92 = scmp.eq.s32.totalorder %s24, 0
      %p93 = por %p91, %p92
      %s95 = sadd.s32 %s94, 1
      %p98 = scmp.eq.s32.totalorder %s18, 1
      %p99 = scmp.ne.s32.totalorder %s94, %s96
      %p100 = scmp.eq.s32.totalorder %s18, 0
      %p101 = por %p99, %p100
      %p102 = scmp.ne.s32.totalorder %s94, %s96
      %p103 = scmp.eq.s32.totalorder %s23, 1
      %p104 = por %p102, %p103
      %p105 = scmp.ne.s32.totalorder %s96, %s97
      %p106 = scmp.eq.s32.totalorder %s23, 0
      %p107 = por %p105, %p106
      %p108 = scmp.ne.s32.totalorder %s96, %s97
      %p109 = scmp.eq.s32.totalorder %s24, 1
      %p110 = por %p108, %p109
      %p112 = scmp.ne.s32.totalorder %s97, %s111
      %p113 = scmp.eq.s32.totalorder %s24, 0
      %p114 = por %p112, %p113
      %s116 = sadd.s32 %s115, 1
      %p119 = scmp.eq.s32.totalorder %s18, 1
      %p120 = scmp.ne.s32.totalorder %s115, %s117
      %p121 = scmp.eq.s32.totalorder %s18, 0
      %p122 = por %p120, %p121
      %p123 = scmp.ne.s32.totalorder %s115, %s117
      %p124 = scmp.eq.s32.totalorder %s23, 1
      %p125 = por %p123, %p124
      %p126 = scmp.ne.s32.totalorder %s117, %s118
      %p127 = scmp.eq.s32.totalorder %s23, 0
      %p128 = por %p126, %p127
      %p129 = scmp.ne.s32.totalorder %s117, %s118
      %p130 = scmp.eq.s32.totalorder %s24, 1
      %p131 = por %p129, %p130
      %p133 = scmp.ne.s32.totalorder %s118, %s132
      %p134 = scmp.eq.s32.totalorder %s24, 0
      %p135 = por %p133, %p134
      %s136 = ssub.s32 %s18, %s25
      %p137 = scmp.eq.s32.totalorder %s136, 0
      %s139 = sadd.s32 %s138, 1
      %s140 = scalar_select %p137, %s138, %s139
      %p143 = pneg %p137
      %p144 = scmp.eq.s32.totalorder %s18, 1
      %p145 = por %p143, %p144
      %p146 = scmp.ne.s32.totalorder %s138, %s141
      %p147 = scmp.eq.s32.totalorder %s18, 0
      %p148 = por %p146, %p147
      %p149 = scmp.ne.s32.totalorder %s138, %s141
      %p150 = scmp.eq.s32.totalorder %s23, 1
      %p151 = por %p149, %p150
      %p152 = scmp.ne.s32.totalorder %s141, %s142
      %p153 = scmp.eq.s32.totalorder %s23, 0
      %p154 = por %p152, %p153
      %p155 = scmp.ne.s32.totalorder %s141, %s142
      %p156 = scmp.eq.s32.totalorder %s24, 1
      %p157 = por %p155, %p156
      %p159 = scmp.ne.s32.totalorder %s142, %s158
      %p160 = scmp.eq.s32.totalorder %s24, 0
      %p161 = por %p159, %p160
      %p162 = scmp.le.s32.totalorder 1, %s18
      %p163 = scmp.lt.s32.totalorder %s18, 3
      %p164 = pnand %p162, %p163
      %p165 = pneg %p164
      // Predicated region
      $region9: #{tpu_custom_call.1} parent=5 // pred_check
        _
      $region10: #{tpu_custom_call.1} parent=5 // pred_check_branch
        %167 = sbr.rel (%p164) target = $region12
      $region11: #{tpu_custom_call.1} parent=5 // pred_region
        %s168 = ssub.s32 %s18, 1
        // Predicated region
        $region13: #{tpu_custom_call.1} parent=11 // pred_check
          %p169 = pneg %p65
        $region14: #{tpu_custom_call.1} parent=11 // pred_check_branch
          %171 = sbr.rel (%p169) target = $region16
        $region15: #{tpu_custom_call.1} parent=11 // pred_region
          %s173 = ssub.s32 128, 128
          %174 = vsyncadd [#allocation6], %s173
          %s176 = sshll.u32 [#allocation5], 4
          %s177 = int_to_ptr.vmem [resolvable:$true] %s176
          %179 = dma.hbm_to_vmem [thread:$0]  %s1, 128, %s177, [#allocation6]
        $region16: #{tpu_custom_call.1} parent=11 // pred_fallthru
          _
        // Predicated region
        $region17: #{tpu_custom_call.1} parent=11 // pred_check
          %p180 = pneg %p86
        $region18: #{tpu_custom_call.1} parent=11 // pred_check_branch
          %182 = sbr.rel (%p180) target = $region20
        $region19: #{tpu_custom_call.1} parent=11 // pred_region
          _
        $region20: #{tpu_custom_call.1} parent=11 // pred_fallthru
          _
        // Predicated region
        $region21: #{tpu_custom_call.1} parent=11 // pred_check
          %p183 = pneg %p107
        $region22: #{tpu_custom_call.1} parent=11 // pred_check_branch
          %185 = sbr.rel (%p183) target = $region24
        $region23: #{tpu_custom_call.1} parent=11 // pred_region
          _
        $region24: #{tpu_custom_call.1} parent=11 // pred_fallthru
          _
        // Predicated region
        $region25: #{tpu_custom_call.1} parent=11 // pred_check
          %p186 = pneg %p128
        $region26: #{tpu_custom_call.1} parent=11 // pred_check_branch
          %188 = sbr.rel (%p186) target = $region28
        $region27: #{tpu_custom_call.1} parent=11 // pred_region
          _
        $region28: #{tpu_custom_call.1} parent=11 // pred_fallthru
          _
      $region12: #{tpu_custom_call.1} parent=5 // pred_fallthru
        _
      %p189 = scmp.lt.s32.totalorder %s18, 2
      // Predicated region
      $region29: #{tpu_custom_call.1} parent=5 // pred_check
        %p190 = pneg %p189
      $region30: #{tpu_custom_call.1} parent=5 // pred_check_branch
        %192 = sbr.rel (%p190) target = $region32
      $region31: #{tpu_custom_call.1} parent=5 // pred_region
        // Predicated region
        $region33: #{tpu_custom_call.1} parent=31 // pred_check
          %p193 = pneg %p38
        $region34: #{tpu_custom_call.1} parent=31 // pred_check_branch
          %195 = sbr.rel (%p193) target = $region36
        $region35: #{tpu_custom_call.1} parent=31 // pred_region
          %s196 = sand.u32 %s28, 1
          %s197 = scalar_lea.sflag [#allocation3], %s196
          %s198 = sand.u32 %s28, 1
          %s199 = smul.addr %s198, 8
          %s200 = scalar_lea.vmem [#allocation2], %s199
          %s202 = ssub.s32 128, 128
          %203 = vsyncadd %s197, %s202
          %s204 = smul.addr %s18, 2
          %s205 = smul.addr %s204, 64
          %s206 = scalar_lea.hbm %s0, %s205
          %s208 = sshll.u32 %s200, 4
          %s209 = int_to_ptr.vmem [resolvable:$true] %s208
          %211 = dma.hbm_to_vmem [thread:$0]  %s206, 128, %s209, %s197
        $region36: #{tpu_custom_call.1} parent=31 // pred_fallthru
          _
      $region32: #{tpu_custom_call.1} parent=5 // pred_fallthru
        _
      %p212 = scmp.le.s32.totalorder 1, %s18
      %p213 = scmp.lt.s32.totalorder %s18, 3
      %p214 = pnand %p212, %p213
      %p215 = pneg %p214
      // Predicated region
      $region37: #{tpu_custom_call.1} parent=5 // pred_check
        _
      $region38: #{tpu_custom_call.1} parent=5 // pred_check_branch
        %217 = sbr.rel (%p214) target = $region40
      $region39: #{tpu_custom_call.1} parent=5 // pred_region
        %s218 = ssub.s32 %s18, 1
        %s219 = sand.u32 %s31, 1
        %s220 = scalar_lea.sflag [#allocation3], %s219
        %s221 = sand.u32 %s31, 1
        %s222 = smul.addr %s221, 8
        %s223 = scalar_lea.vmem [#allocation2], %s222
        // Predicated region
        $region41: #{tpu_custom_call.1} parent=39 // pred_check
          %p224 = pneg %p44
        $region42: #{tpu_custom_call.1} parent=39 // pred_check_branch
          %226 = sbr.rel (%p224) target = $region44
        $region43: #{tpu_custom_call.1} parent=39 // pred_region
          %227 = dma.done %s220, 128
        $region44: #{tpu_custom_call.1} parent=39 // pred_fallthru
          _
        // Predicated region
        $region45: #{tpu_custom_call.1} parent=39 // pred_check
          %p228 = pneg %p65
        $region46: #{tpu_custom_call.1} parent=39 // pred_check_branch
          %230 = sbr.rel (%p228) target = $region48
        $region47: #{tpu_custom_call.1} parent=39 // pred_region
          %231 = dma.done [#allocation6], 128
        $region48: #{tpu_custom_call.1} parent=39 // pred_fallthru
          _
        %s232 = sand.u32 %s31, 1
        %s233 = scalar_lea.sflag [#allocation3], %s232
        %s234 = sand.u32 %s31, 1
        %s235 = smul.addr %s234, 8
        %s236 = scalar_lea.vmem [#allocation2], %s235
        %p237 = pneg %p44
        %p238 = pneg %p41
        %p239 = pneg %p65
        %p240 = pneg %p62
        %p241 = pneg %p86
        %p242 = pneg %p83
        %p243 = pneg %p107
        %p244 = pneg %p104
        %p245 = pneg %p128
        %p246 = pneg %p125
        %p247 = pneg %p154
        %p248 = pneg %p151
        %s249 = sand.u32 %s141, 1
        %s250 = scalar_lea.sflag [#allocation4], %s249
        %s251 = sand.u32 %s141, 1
        %s252 = smul.addr %s251, 16
        %s253 = scalar_lea.vmem [#allocation7], %s252
        %v254 = vld [vmem:[#allocation5] sm:$0xff]
        %v255 = vld [vmem:[%s2] sm:$0xff]
        %v256 = vld [vmem:[%s3] sm:$0xff]
        %v257 = vld [vmem:[%s4] sm:$0x3]
        %s258 = scalar_lea.vmem %s4, 2
        %v259 = vld [vmem:[%s258] sm:$0x3]
        %s260 = scalar_lea.vmem %s4, 4
        %v261 = vld [vmem:[%s260] sm:$0x3]
        %s262 = scalar_lea.vmem %s4, 6
        %v263 = vld [vmem:[%s262] sm:$0x3]
        %s264 = scalar_lea.vmem %s4, 10
        %v265 = vld [vmem:[%s264] sm:$0x3]
        %s266 = scalar_lea.vmem %s4, 12
        %v267 = vld [vmem:[%s266] sm:$0x3]
        %s268 = scalar_lea.vmem %s4, 14
        %v269 = vld [vmem:[%s268] sm:$0x3]
        %s270 = scalar_lea.vmem %s4, 16
        %v271 = vld [vmem:[%s270] sm:$0x3]
        %v272 = vld [vmem:[%s223] sm:$0xff]
        %v274 = vcombine.high %v272, %v272
        %275 = vrot.lane.b32.xlu0 %v272, 17
        %v276 = vpop.permute.xlu0 %275
        %277 = vrot.lane.b32.xlu0 %v274, 17
        %v278 = vpop.permute.xlu0 %277
        %vm279 = vcmask 138240
        %v280 = vsel %vm279, %v276, %v278
        %v283 = vsel %vm279, 0.0, %v276
        %v285 = vlaneseq
        %v286 = vshrl.u32 %v285, 7
        %v287 = vsub.s32 0, %v286
        %v288 = vrot.slane %v257, %v287
        %v289 = vlaneseq
        %v290 = vshrl.u32 %v289, 7
        %v291 = vsub.s32 1, %v290
        %v292 = vrot.slane %v257, %v291
        %v295 = vmul.f32 %v283, %v288
        %v296 = vmul.f32 %v280, %v292
        %297 = vrot.lane.b32.xlu0 %v272, 16
        %v298 = vpop.permute.xlu0 %297
        %299 = vrot.lane.b32.xlu0 %v274, 16
        %v300 = vpop.permute.xlu0 %299
        %vm301 = vcmask 130048
        %v302 = vsel %vm301, %v298, %v300
        %v305 = vsel %vm301, 0.0, %v298
        %v307 = vlaneseq
        %v308 = vshrl.u32 %v307, 7
        %v309 = vsub.s32 0, %v308
        %v310 = vrot.slane %v259, %v309
        %v311 = vlaneseq
        %v312 = vshrl.u32 %v311, 7
        %v313 = vsub.s32 1, %v312
        %v314 = vrot.slane %v259, %v313
        %v317 = vmul.f32 %v305, %v310
        %v318 = vmul.f32 %v302, %v314
        %319 = vrot.lane.b32.xlu0 %v272, 15
        %v320 = vpop.permute.xlu0 %319
        %321 = vrot.lane.b32.xlu0 %v274, 15
        %v322 = vpop.permute.xlu0 %321
        %vm323 = vcmask 121856
        %v324 = vsel %vm323, %v320, %v322
        %v327 = vsel %vm323, 0.0, %v320
        %v329 = vlaneseq
        %v330 = vshrl.u32 %v329, 7
        %v331 = vsub.s32 0, %v330
        %v332 = vrot.slane %v261, %v331
        %v333 = vlaneseq
        %v334 = vshrl.u32 %v333, 7
        %v335 = vsub.s32 1, %v334
        %v336 = vrot.slane %v261, %v335
        %v339 = vmul.f32 %v327, %v332
        %v340 = vmul.f32 %v324, %v336
        %341 = vrot.lane.b32.xlu0 %v272, 1
        %v342 = vpop.permute.xlu0 %341
        %343 = vrot.lane.b32.xlu0 %v274, 1
        %v344 = vpop.permute.xlu0 %343
        %vm345 = vcmask 7168
        %v346 = vsel %vm345, %v342, %v344
        %v349 = vsel %vm345, 0.0, %v342
        %v351 = vlaneseq
        %v352 = vshrl.u32 %v351, 7
        %v353 = vsub.s32 0, %v352
        %v354 = vrot.slane %v263, %v353
        %v355 = vlaneseq
        %v356 = vshrl.u32 %v355, 7
        %v357 = vsub.s32 1, %v356
        %v358 = vrot.slane %v263, %v357
        %v361 = vmul.f32 %v349, %v354
        %v362 = vmul.f32 %v346, %v358
        %363 = vrot.lane.b32.xlu0 %v272, 127
        %v364 = vpop.permute.xlu0 %363
        %365 = vrot.lane.b32.xlu0 %v274, 127
        %v366 = vpop.permute.xlu0 %365
        %vm367 = vcmask 1039360
        %v368 = vsel %vm367, %v364, %v366
        %v371 = vsel %vm367, %v366, 0.0
        %v373 = vlaneseq
        %v374 = vshrl.u32 %v373, 7
        %v375 = vsub.s32 0, %v374
        %v376 = vrot.slane %v265, %v375
        %v377 = vlaneseq
        %v378 = vshrl.u32 %v377, 7
        %v379 = vsub.s32 1, %v378
        %v380 = vrot.slane %v265, %v379
        %v383 = vmul.f32 %v368, %v376
        %v384 = vmul.f32 %v371, %v380
        %385 = vrot.lane.b32.xlu0 %v272, 113
        %v386 = vpop.permute.xlu0 %385
        %387 = vrot.lane.b32.xlu0 %v274, 113
        %v388 = vpop.permute.xlu0 %387
        %vm389 = vcmask 924672
        %v390 = vsel %vm389, %v386, %v388
        %v393 = vsel %vm389, %v388, 0.0
        %v395 = vlaneseq
        %v396 = vshrl.u32 %v395, 7
        %v397 = vsub.s32 0, %v396
        %v398 = vrot.slane %v267, %v397
        %v399 = vlaneseq
        %v400 = vshrl.u32 %v399, 7
        %v401 = vsub.s32 1, %v400
        %v402 = vrot.slane %v267, %v401
        %v405 = vmul.f32 %v390, %v398
        %v406 = vmul.f32 %v393, %v402
        %407 = vrot.lane.b32.xlu0 %v272, 112
        %v408 = vpop.permute.xlu0 %407
        %409 = vrot.lane.b32.xlu0 %v274, 112
        %v410 = vpop.permute.xlu0 %409
        %vm411 = vcmask 916480
        %v412 = vsel %vm411, %v408, %v410
        %v415 = vsel %vm411, %v410, 0.0
        %v417 = vlaneseq
        %v418 = vshrl.u32 %v417, 7
        %v419 = vsub.s32 0, %v418
        %v420 = vrot.slane %v269, %v419
        %v421 = vlaneseq
        %v422 = vshrl.u32 %v421, 7
        %v423 = vsub.s32 1, %v422
        %v424 = vrot.slane %v269, %v423
        %v427 = vmul.f32 %v412, %v420
        %v428 = vmul.f32 %v415, %v424
        %429 = vrot.lane.b32.xlu0 %v272, 111
        %v430 = vpop.permute.xlu0 %429
        %431 = vrot.lane.b32.xlu0 %v274, 111
        %v432 = vpop.permute.xlu0 %431
        %vm433 = vcmask 908288
        %v434 = vsel %vm433, %v430, %v432
        %v437 = vsel %vm433, %v432, 0.0
        %v439 = vlaneseq
        %v440 = vshrl.u32 %v439, 7
        %v441 = vsub.s32 0, %v440
        %v442 = vrot.slane %v271, %v441
        %v443 = vlaneseq
        %v444 = vshrl.u32 %v443, 7
        %v445 = vsub.s32 1, %v444
        %v446 = vrot.slane %v271, %v445
        %v449 = vmul.f32 %v434, %v442
        %v450 = vmul.f32 %v437, %v446
        %v453 = vrot.slane %v317, 4
        %v454 = vrot.slane %v318, 4
        %v459 = vrot.slane %v361, 4
        %v460 = vrot.slane %v362, 4
        %v466 = vrot.slane %v383, 4
        %v467 = vrot.slane %v384, 4
        %v472 = vrot.slane %v427, 4
        %v473 = vrot.slane %v428, 4
        %vm476 = vcmask 1043456
        %v477 = vsel %vm476, %v295, %v453
        %v478 = vsel %vm476, %v296, %v454
        %v479 = vsel %vm476, %v339, %v459
        %v480 = vsel %vm476, %v340, %v460
        %v481 = vsel %vm476, %v272, %v466
        %v482 = vsel %vm476, %v274, %v467
        %v483 = vsel %vm476, %v405, %v472
        %v484 = vsel %vm476, %v406, %v473
        %v485 = vsel %vm476, %v449, 1.0
        %v486 = vsel %vm476, %v450, 1.0
        %vm487 = vcmask 302080
        %v489 = vsel %vm487, %v254, 0
        %vm491 = vcmask 1044480
        %v493 = vsel %vm491, %v485, 0
        %v496 = vsel %vm491, %v486, 0
        %498 = vmatprep.subr.mxu0 0.0
        %499 = vmatpush1.msra.mxu0 0.0
        %500 = vmatprep.subr.mxu0 0.0
        %501 = vmatpush1.msra.mxu0 0.0
        %502 = vmatprep.subr.mxu0 0.0
        %503 = vmatpush1.msra.mxu0 0.0
        %504 = vmatprep.subr.mxu0 0.0
        %505 = vmatpush1.msra.mxu0 0.0
        %506 = vmatprep.subr.mxu0 0.0
        %507 = vmatpush1.msra.mxu0 0.0
        %508 = vmatprep.subr.mxu0 0.0
        %509 = vmatpush1.msra.mxu0 0.0
        %510 = vmatprep.subr.mxu0 0.0
        %511 = vmatpush1.msra.mxu0 0.0
        %512 = vmatprep.subr.mxu0 0.0
        %513 = vmatpush1.msra.mxu0 0.0
        %514 = vmatprep.subr.mxu0 0.0
        %515 = vmatpush1.msra.mxu0 0.0
        %516 = vmatprep.subr.mxu0 0.0
        %517 = vmatpush1.msra.mxu0 0.0
        %518 = vmatprep.subr.mxu0 0.0
        %519 = vmatpush1.msra.mxu0 0.0
        %520 = vmatprep.subr.mxu0 %v496
        %521 = vmatpush1.msra.mxu0 %v493
        %522 = vmatprep.subr.mxu0 %v484
        %523 = vmatpush1.msra.mxu0 %v483
        %524 = vmatprep.subr.mxu0 %v482
        %525 = vmatpush1.msra.mxu0 %v481
        %526 = vmatprep.subr.mxu0 %v480
        %527 = vmatpush1.msra.mxu0 %v479
        %528 = vmatprep.subr.mxu0 %v478
        %529 = vmatpush1.msra.mxu0 %v477
        %530 = vmatprep.subr.mxu0 0.0
        %531 = vmatpush2.msra.mxu0 0.0
        %532 = vmatprep.subr.mxu0 0.0
        %533 = vmatpush2.msra.mxu0 0.0
        %534 = vmatprep.subr.mxu0 0.0
        %535 = vmatpush2.msra.mxu0 0.0
        %536 = vmatprep.subr.mxu0 0.0
        %537 = vmatpush2.msra.mxu0 0.0
        %538 = vmatprep.subr.mxu0 0.0
        %539 = vmatpush2.msra.mxu0 0.0
        %540 = vmatprep.subr.mxu0 0.0
        %541 = vmatpush2.msra.mxu0 0.0
        %542 = vmatprep.subr.mxu0 0.0
        %543 = vmatpush2.msra.mxu0 0.0
        %544 = vmatprep.subr.mxu0 0.0
        %545 = vmatpush2.msra.mxu0 0.0
        %546 = vmatprep.subr.mxu0 0.0
        %547 = vmatpush2.msra.mxu0 0.0
        %548 = vmatprep.subr.mxu0 0.0
        %549 = vmatpush2.msra.mxu0 0.0
        %550 = vmatprep.subr.mxu0 0.0
        %551 = vmatpush2.msra.mxu0 0.0
        %552 = vmatprep.subr.mxu0 0.0
        %553 = vmatpush2.msra.mxu0 0.0
        %554 = vmatprep.subr.mxu0 0.0
        %555 = vmatpush2.msra.mxu0 0.0
        %556 = vmatprep.subr.mxu0 0.0
        %557 = vmatpush2.msra.mxu0 0.0
        %558 = vmatprep.subr.mxu0 0.0
        %559 = vmatpush2.msra.mxu0 0.0
        %560 = vmatprep.subr.mxu0 0.0
        %561 = vmatpush2.msra.mxu0 0.0
        %562 = vmatprep.mubr.f32.mxu0 0.0
        %563 = vmatmul.mubr.f32.gmra.mxu0 %v489
        %v564 = vpop.f32.mrf.mxu0
        %v565 = vadd.f32 0.0, %v564
        %v566 = vpop.f32.mrf.mxu0
        %v567 = vadd.f32 0.0, %v566
        %568 = vdwg.mxu0
        %v569 = vadd.f32 %v565, %v567
        %570 = vadd.xlane.f32.xlu0 %v569
        %v571 = vpop.xlane.xlu0 %570
        %v572 = vrot.slane %v571, 4
        %v573 = vadd.f32 %v571, %v572
        %v574 = vrot.slane %v573, 2
        %v575 = vadd.f32 %v573, %v574
        %v576 = vrot.slane %v575, 1
        %v577 = vadd.f32 %v575, %v576
        %s578 = vtos %v577
        %v579 = vstv %s578
        %v580 = vmul.f32 %v565, %v565
        %v581 = vmul.f32 %v567, %v567
        %v582 = vadd.f32 %v580, %v581
        %583 = vadd.xlane.f32.xlu0 %v582
        %v584 = vpop.xlane.xlu0 %583
        %v585 = vrot.slane %v584, 4
        %v586 = vadd.f32 %v584, %v585
        %v587 = vrot.slane %v586, 2
        %v588 = vadd.f32 %v586, %v587
        %v589 = vrot.slane %v588, 1
        %v590 = vadd.f32 %v588, %v589
        %s591 = vtos %v590
        %v592 = vstv %s591
        %v593 = vmul.f32 %v579, 0.00048828125
        %v594 = vmul.f32 %v592, 0.00048828125
        %v595 = vmul.f32 %v593, %v593
        %v596 = vsub.f32 %v594, %v595
        %v597 = vmax.f32 %v596, 0.0
        %v598 = vadd.f32 %v597, 1e-05
        %v599 = vrsqrt.pop %v598
        %v600 = vsub.f32 %v565, %v593
        %v601 = vsub.f32 %v567, %v593
        %v602 = vmul.f32 %v600, %v599
        %v603 = vmul.f32 %v601, %v599
        %605 = vset.pattern.permute.xlu0 0
        %606 = vperm.xlu0 %605, %v255
        %v607 = vpop.permute.xlu0 %606
        %v609 = vmul.f32 %v602, %v607
        %v610 = vmul.f32 %v603, %v607
        %612 = vset.pattern.permute.xlu0 0
        %613 = vperm.xlu0 %612, %v256
        %v614 = vpop.permute.xlu0 %613
        %v616 = vadd.f32 %v609, %v614
        %v617 = vadd.f32 %v610, %v614
        %v618 = vmax.f32 %v616, 0.0
        %v619 = vmax.f32 %v617, 0.0
        %620 = vst [vmem:[%s253] sm:$0xff] %v618
        %621 = vst [vmem:[%s253 + $0x8] sm:$0xff] %v619
        %s622 = sand.u32 %s141, 1
        %s623 = scalar_lea.sflag [#allocation4], %s622
        %s624 = sand.u32 %s141, 1
        %s625 = smul.addr %s624, 16
        %s626 = scalar_lea.vmem [#allocation7], %s625
        // Predicated region
        $region49: #{tpu_custom_call.1} parent=39 // pred_check
          %p627 = pneg %p151
        $region50: #{tpu_custom_call.1} parent=39 // pred_check_branch
          %629 = sbr.rel (%p627) target = $region52
        $region51: #{tpu_custom_call.1} parent=39 // pred_region
          %s631 = ssub.s32 256, 256
          %632 = vsyncadd %s623, %s631
          %s633 = smul.addr %s23, 2
          %s634 = smul.addr %s633, 128
          %s635 = scalar_lea.hbm %s5, %s634
          %s637 = sshll.u32 %s626, 4
          %s638 = int_to_ptr.vmem [resolvable:$true] %s637
          %640 = dma.vmem_to_hbm [thread:$0]  %s638, 256, %s635, %s623
        $region52: #{tpu_custom_call.1} parent=39 // pred_fallthru
          _
      $region40: #{tpu_custom_call.1} parent=5 // pred_fallthru
        _
      %p641 = scmp.le.s32.totalorder 2, %s18
      // Predicated region
      $region53: #{tpu_custom_call.1} parent=5 // pred_check
        %p642 = pneg %p641
      $region54: #{tpu_custom_call.1} parent=5 // pred_check_branch
        %644 = sbr.rel (%p642) target = $region56
      $region55: #{tpu_custom_call.1} parent=5 // pred_region
        %s645 = ssub.s32 %s18, 2
        // Predicated region
        $region57: #{tpu_custom_call.1} parent=55 // pred_check
          %p646 = pneg %p157
        $region58: #{tpu_custom_call.1} parent=55 // pred_check_branch
          %648 = sbr.rel (%p646) target = $region60
        $region59: #{tpu_custom_call.1} parent=55 // pred_region
          %s649 = sand.u32 %s142, 1
          %s650 = scalar_lea.sflag [#allocation4], %s649
          %s651 = sand.u32 %s142, 1
          %s652 = smul.addr %s651, 16
          %s653 = scalar_lea.vmem [#allocation7], %s652
          %654 = dma.done %s650, 256
        $region60: #{tpu_custom_call.1} parent=55 // pred_fallthru
          _
      $region56: #{tpu_custom_call.1} parent=5 // pred_fallthru
        _
    $region6: #{tpu_custom_call.1} parent=1 // loop_footer
      %s22 = sadd.s32 1, %s18
    $region7: #{tpu_custom_call.1} parent=1 // loop_footer_branch
      %17 = sbr.rel target = $region3
    $region8: #{tpu_custom_call.1} parent=1 // loop_exit
      _
    %655 = vsyncpa [#allocation3], 1
    %s656 = scalar_lea.sflag [#allocation3], 1
    %657 = vsyncpa %s656, 1
    %658 = vsyncpa [#allocation6], 1
    %659 = vsyncpa [#allocation4], 1
    %s660 = scalar_lea.sflag [#allocation4], 1
    %661 = vsyncpa %s660, 1

</llo_original>
